<compile_context>
chip_gen: v7x
topology: tpu7x:2x2x1
jax: 0.10.0
libtpu: 0.0.40
codegen_flags: <defaults>
</compile_context>

<pallas_src>
import numpy as np
import jax
import jax.numpy as jnp
from jax.experimental import pallas as pl
from jax.experimental.pallas import tpu as pltpu


def _round_up(x, m):
    return (x + m - 1) // m * m


# ----------------------------------------------------------------------------
# Deterministic parameter construction (replaces librosa_mel_fn / hann_window)
# ----------------------------------------------------------------------------
def _hz_to_mel(freqs):
    freqs = np.asarray(freqs, dtype=np.float64)
    f_sp = 200.0 / 3.0
    mels = freqs / f_sp
    min_log_hz = 1000.0
    min_log_mel = min_log_hz / f_sp
    logstep = np.log(6.4) / 27.0
    log_t = freqs >= min_log_hz
    mels = np.where(
        log_t, min_log_mel + np.log(np.maximum(freqs, 1e-10) / min_log_hz) / logstep, mels
    )
    return mels


def _mel_to_hz(mels):
    mels = np.asarray(mels, dtype=np.float64)
    f_sp = 200.0 / 3.0
    freqs = f_sp * mels
    min_log_hz = 1000.0
    min_log_mel = min_log_hz / f_sp
    logstep = np.log(6.4) / 27.0
    log_t = mels >= min_log_mel
    freqs = np.where(log_t, min_log_hz * np.exp(logstep * (mels - min_log_mel)), freqs)
    return freqs


def mel_filterbank(sr, n_fft, n_mels, fmin, fmax):
    """Slaney-scale, slaney-normalized mel filterbank (== librosa.filters.mel defaults)."""
    n_freq = n_fft // 2 + 1
    fft_freqs = np.linspace(0.0, sr / 2.0, n_freq)
    mel_pts = _mel_to_hz(np.linspace(_hz_to_mel(fmin), _hz_to_mel(fmax), n_mels + 2))
    fdiff = np.diff(mel_pts)
    ramps = mel_pts[:, None] - fft_freqs[None, :]
    weights = np.zeros((n_mels, n_freq), dtype=np.float64)
    for i in range(n_mels):
        lower = -ramps[i] / fdiff[i]
        upper = ramps[i + 2] / fdiff[i + 1]
        weights[i] = np.maximum(0.0, np.minimum(lower, upper))
    enorm = 2.0 / (mel_pts[2 : n_mels + 2] - mel_pts[:n_mels])
    weights *= enorm[:, None]
    return weights.astype(np.float32)


# ----------------------------------------------------------------------------
# Pallas kernel: fused windowed-DFT matmul + power + magnitude + energy + mel
# ----------------------------------------------------------------------------
def _make_audio2mel_kernel(n_freq_pad, energy_row):
    def kernel(frames_ref, basis_ref, mel_ref, mag_ref, out_ref):
        # frames_ref: (TILE_N, n_fft_pad)        audio frames (window folded into basis)
        # basis_ref : (n_fft_pad, 2*n_freq_pad)  [win*cos | win*(-sin)] fused DFT basis
        # mel_ref   : (n_out_pad, n_freq_pad)    mel filterbank (zero rows >= n_mel)
        # mag_ref   : (n_freq_pad, TILE_N)       |STFT|, transposed (freq on sublanes)
        # out_ref   : (n_out_pad, TILE_N)        rows [0,n_mel) = log-mel, row n_mel = energy
        ri = jnp.dot(frames_ref[...], basis_ref[...],
                     preferred_element_type=jnp.float32)          # one MXU pass: (T, 2F)
        real = ri[:, :n_freq_pad]
        imag = ri[:, n_freq_pad:]
        power = real * real + imag * imag                         # computed once
        power_t = power.T                                         # XLU transpose -> (F, T)
        mag_t = jnp.sqrt(power_t)                                 # EUP sqrt
        mag_ref[...] = mag_t
        energy = jnp.sqrt(jnp.sum(power_t, axis=0, keepdims=True))  # (1, T)
        mel = jnp.dot(mel_ref[...], mag_t,
                      preferred_element_type=jnp.float32)         # (M, T), already transposed
        logmel = jnp.log10(jnp.maximum(mel, 1e-5))
        row = jax.lax.broadcasted_iota(jnp.int32, logmel.shape, 0)
        out_ref[...] = jnp.where(row == energy_row, energy, logmel)

    return kernel


class Audio2Mel:
    def __init__(self, n_fft, hop_length, win_length, sampling_rate,
                 n_mel_channels, mel_fmin, mel_fmax, compute_dtype=jnp.float32):
        self.n_fft = n_fft
        self.hop_length = hop_length
        self.win_length = win_length
        self.sampling_rate = sampling_rate
        self.n_mel_channels = n_mel_channels
        self.compute_dtype = compute_dtype  # optionally bf16 on v6e/v7x for the DFT matmul

        self.n_freq = n_fft // 2 + 1
        self.n_fft_pad = _round_up(n_fft, 128)
        self.n_freq_pad = _round_up(self.n_freq, 128)
        self.n_out_pad = _round_up(n_mel_channels + 1, 128)   # +1 row for energy

        # torch.hann_window (periodic), centered/padded to n_fft like torch.stft does.
        n = np.arange(win_length)
        window = 0.5 - 0.5 * np.cos(2.0 * np.pi * n / win_length)
        if win_length < n_fft:
            lpad = (n_fft - win_length) // 2
            window = np.pad(window, (lpad, n_fft - win_length - lpad))

        # One-sided real DFT basis with the Hann window folded in, fused as
        # [win*cos | win*(-sin)] and zero-padded to lane-dense (n_fft_pad, 2*n_freq_pad).
        t = np.arange(n_fft)[:, None].astype(np.float64)
        f = np.arange(self.n_freq)[None, :].astype(np.float64)
        ang = 2.0 * np.pi * t * f / n_fft
        cos_b = np.cos(ang) * window[:, None]
        sin_b = -np.sin(ang) * window[:, None]
        basis = np.zeros((self.n_fft_pad, 2 * self.n_freq_pad), dtype=np.float32)
        basis[:n_fft, : self.n_freq] = cos_b
        basis[:n_fft, self.n_freq_pad : self.n_freq_pad + self.n_freq] = sin_b
        self.basis = jnp.asarray(basis, compute_dtype)

        mel = mel_filterbank(sampling_rate, n_fft, n_mel_channels, mel_fmin,
                             mel_fmax if mel_fmax is not None else sampling_rate / 2.0)
        mel_pad = np.zeros((self.n_out_pad, self.n_freq_pad), dtype=np.float32)
        mel_pad[:n_mel_channels, : self.n_freq] = mel
        self.mel_pad = jnp.asarray(mel_pad)                   # mel matmul stays f32

        self._kernel = _make_audio2mel_kernel(self.n_freq_pad, n_mel_channels)

    # TODO(synk): librosa.piptrack has no Pallas/clean-JAX equivalent; this is a
    # simplified reimplementation (threshold + local max + parabolic interpolation).
    def _piptrack_pitch(self, S, fmin=0.0, fmax=8000.0, threshold=0.1):
        # S: (n_freq, n_frames)
        sr = float(self.sampling_rate)
        fmax = min(fmax, sr / 2.0)
        n_freq, n_frames = S.shape
        fft_freqs = jnp.linspace(0.0, sr / 2.0, n_freq)

        avg = 0.5 * (S[2:] - S[:-2])
        den = 2.0 * S[1:-1] - S[2:] - S[:-2]
        shift = avg / (den + (jnp.abs(den) < 1e-30).astype(S.dtype))
        avg = jnp.pad(avg, ((1, 1), (0, 0)))
        shift = jnp.pad(shift, ((1, 1), (0, 0)))
        dskew = 0.5 * avg * shift

        ref = threshold * jnp.max(S, axis=0, keepdims=True)
        x = S * (S > ref)
        xp = jnp.pad(x, ((1, 1), (0, 0)), mode="edge")
        localmax = (x > xp[:-2]) & (x >= xp[2:])
        freq_mask = ((fmin <= fft_freqs) & (fft_freqs < fmax))[:, None]
        valid = freq_mask & localmax

        bins = jnp.arange(n_freq, dtype=S.dtype)[:, None]
        pitches = jnp.where(valid, (bins + shift) * sr / self.n_fft, 0.0)
        mags = jnp.where(valid, S + dskew, 0.0)
        idx = jnp.argmax(mags, axis=0)
        return pitches[idx, jnp.arange(n_frames)]

    def __call__(self, audio):
        # audio: (B, 1, T) float32
        B = audio.shape[0]
        p = self.n_fft // 2
        x = jnp.pad(audio[:, 0, :], ((0, 0), (p, p)), mode="reflect")
        L = x.shape[1]
        n_frames = 1 + (L - self.n_fft) // self.hop_length

        # TODO(synk): frames are still materialized via an XLA gather in HBM; an
        # in-kernel overlapped-window DMA over the raw audio would remove the
        # n_fft/hop-fold read expansion but is not implemented here.
        frame_idx = (np.arange(n_frames)[:, None] * self.hop_length
                     + np.arange(self.n_fft)[None, :])
        frames = x[:, frame_idx].reshape(B * n_frames, self.n_fft)

        N = B * n_frames
        tile_n = min(256, _round_up(N, 128))                  # 256 keeps v7x (64 MiB VMEM) happy
        n_pad = _round_up(N, tile_n)
        num_tiles = n_pad // tile_n
        frames = jnp.pad(frames, ((0, n_pad - N), (0, self.n_fft_pad - self.n_fft)))
        frames = frames.astype(self.compute_dtype)

        grid_spec = pltpu.PrefetchScalarGridSpec(
            num_scalar_prefetch=0,
            grid=(num_tiles,),
            in_specs=[
                pl.BlockSpec((tile_n, self.n_fft_pad), lambda i: (i, 0)),
                pl.BlockSpec((self.n_fft_pad, 2 * self.n_freq_pad), lambda i: (0, 0)),
                pl.BlockSpec((self.n_out_pad, self.n_freq_pad), lambda i: (0, 0)),
            ],
            out_specs=(
                pl.BlockSpec((self.n_freq_pad, tile_n), lambda i: (0, i)),
                pl.BlockSpec((self.n_out_pad, tile_n), lambda i: (0, i)),
            ),
        )

        mag_t, melout = pl.pallas_call(
            self._kernel,
            grid_spec=grid_spec,
            out_shape=(
                jax.ShapeDtypeStruct((self.n_freq_pad, n_pad), jnp.float32),
                jax.ShapeDtypeStruct((self.n_out_pad, n_pad), jnp.float32),
            ),
            compiler_params=pltpu.CompilerParams(
                dimension_semantics=("parallel",),
                vmem_limit_bytes=64 * 1024 * 1024,
            ),
        )(frames, self.basis, self.mel_pad)

        n_mel = self.n_mel_channels
        log_mel_spec = (melout[:n_mel, :N]
                        .reshape(n_mel, B, n_frames)
                        .transpose(1, 0, 2))                  # (B, n_mel, n_frames)
        energy = melout[n_mel, :N].reshape(B, n_frames)       # (B, n_frames)

        # torch code does magnitude.squeeze(0) -> piptrack, i.e. assumes B == 1;
        # only batch 0's magnitude (first n_frames columns) is consumed here.
        S = mag_t[: self.n_freq, :n_frames]                   # (n_freq, n_frames)
        pitch = self._piptrack_pitch(S)                       # (n_frames,)
        return log_mel_spec, energy, pitch


if __name__ == "__main__":
    n_fft = 64
    hop_length = 16
    win_length = 64
    sampling_rate = 8000
    n_mel_channels = 16
    mel_fmin = 0.0
    mel_fmax = 4000.0

    key = jax.random.PRNGKey(0)
    audio = 0.1 * jax.random.normal(key, (1, 1, 256), dtype=jnp.float32)

    a2m = Audio2Mel(n_fft, hop_length, win_length, sampling_rate,
                    n_mel_channels, mel_fmin, mel_fmax)
    log_mel_spec, energy, pitch = a2m(audio)
    jax.block_until_ready((log_mel_spec, energy, pitch))

    assert log_mel_spec.shape == (1, n_mel_channels, 17)
    assert energy.shape == (1, 17)
    assert pitch.shape == (17,)
    print("KERNEL_OK")
</pallas_src>

<mosaic_0001>
module attributes {stable_mosaic.version = 11 : i64} {
  func.func @kernel(%arg0: i32, %arg1: memref<128x128xf32, #tpu.memory_space<vmem>>, %arg2: memref<128x256xf32, #tpu.memory_space<vmem>>, %arg3: memref<128x128xf32, #tpu.memory_space<vmem>>, %arg4: memref<128x128xf32, #tpu.memory_space<vmem>>, %arg5: memref<128x128xf32, #tpu.memory_space<vmem>>) attributes {dimension_semantics = [#tpu.dimension_semantics<parallel>], iteration_bounds = array<i64: 1>, scalar_prefetch = 0 : i64, scratch_operands = 0 : i64, tpu.core_type = #tpu.core_type<tc>, window_params = [{transform_indices = @transform_0, window_bounds = array<i64: 128, 128>}, {pipeline_mode = #tpu.pipeline_mode<synchronous>, transform_indices = @transform_1, window_bounds = array<i64: 128, 256>}, {pipeline_mode = #tpu.pipeline_mode<synchronous>, transform_indices = @transform_2, window_bounds = array<i64: 128, 128>}, {transform_indices = @transform_3, window_bounds = array<i64: 128, 128>}, {transform_indices = @transform_4, window_bounds = array<i64: 128, 128>}]} {
    %c0 = arith.constant 0 : index
    %c0_0 = arith.constant 0 : index
    %0 = vector.load %arg1[%c0, %c0_0] : memref<128x128xf32, #tpu.memory_space<vmem>>, vector<128x128xf32>
    %c0_1 = arith.constant 0 : index
    %c0_2 = arith.constant 0 : index
    %1 = vector.load %arg2[%c0_1, %c0_2] : memref<128x256xf32, #tpu.memory_space<vmem>>, vector<128x256xf32>
    %cst = arith.constant dense<0.000000e+00> : vector<128x256xf32>
    %2 = tpu.matmul %0, %1, %cst {dimension_numbers = #tpu.dot_dimension_numbers<[1], [0], [0], [1], [0, 0, 1, 1], [], []>} : vector<128x128xf32>, vector<128x256xf32>, vector<128x256xf32> -> vector<128x256xf32>
    %3 = vector.extract_strided_slice %2 {offsets = [0, 0], sizes = [128, 128], strides = [1, 1]} : vector<128x256xf32> to vector<128x128xf32>
    %4 = vector.extract_strided_slice %2 {offsets = [0, 128], sizes = [128, 128], strides = [1, 1]} : vector<128x256xf32> to vector<128x128xf32>
    %5 = arith.mulf %3, %3 : vector<128x128xf32>
    %6 = arith.mulf %4, %4 : vector<128x128xf32>
    %7 = arith.addf %5, %6 : vector<128x128xf32>
    %8 = tpu.transpose %7, [1, 0] : vector<128x128xf32> -> vector<128x128xf32>
    %9 = math.sqrt %8 : vector<128x128xf32>
    %c0_3 = arith.constant 0 : index
    %c0_4 = arith.constant 0 : index
    %10 = vector.load %arg4[%c0_3, %c0_4] : memref<128x128xf32, #tpu.memory_space<vmem>>, vector<128x128xf32>
    tpu.vector_store %arg4[%c0_3, %c0_4], %9 {strides = array<i32>} : memref<128x128xf32, #tpu.memory_space<vmem>>, vector<128x128xf32>,
    %cst_5 = arith.constant dense<0.000000e+00> : vector<128xf32>
    %11 = vector.multi_reduction <add>, %8, %cst_5 [0] : vector<128x128xf32> to vector<128xf32>
    %12 = vector.shape_cast %11 : vector<128xf32> to vector<1x128xf32>
    %13 = math.sqrt %12 : vector<1x128xf32>
    %c0_6 = arith.constant 0 : index
    %c0_7 = arith.constant 0 : index
    %14 = vector.load %arg3[%c0_6, %c0_7] : memref<128x128xf32, #tpu.memory_space<vmem>>, vector<128x128xf32>
    %cst_8 = arith.constant dense<0.000000e+00> : vector<128x128xf32>
    %15 = tpu.matmul %14, %9, %cst_8 {dimension_numbers = #tpu.dot_dimension_numbers<[1], [0], [0], [1], [0, 0, 1, 1], [], []>} : vector<128x128xf32>, vector<128x128xf32>, vector<128x128xf32> -> vector<128x128xf32>
    %cst_9 = arith.constant 9.99999974E-6 : f32
    %16 = vector.broadcast %cst_9 : f32 to vector<128x128xf32>
    %17 = arith.maximumf %15, %16 : vector<128x128xf32>
    %18 = math.log %17 : vector<128x128xf32>
    %cst_10 = arith.constant 0.434294492 : f32
    %19 = vector.broadcast %cst_10 : f32 to vector<128x128xf32>
    %20 = arith.mulf %18, %19 : vector<128x128xf32>
    %21 = tpu.iota {dimensions = array<i32: 0>} : vector<128x128xi32>
    %c16_i32 = arith.constant 16 : i32
    %22 = vector.broadcast %c16_i32 : i32 to vector<128x128xi32>
    %23 = arith.cmpi eq, %21, %22 : vector<128x128xi32>
    %24 = vector.shape_cast %13 : vector<1x128xf32> to vector<1x128xf32>
    %25 = vector.broadcast %24 : vector<1x128xf32> to vector<128x128xf32>
    %26 = arith.select %23, %25, %20 : vector<128x128xi1>, vector<128x128xf32>
    %c0_11 = arith.constant 0 : index
    %c0_12 = arith.constant 0 : index
    %27 = vector.load %arg5[%c0_11, %c0_12] : memref<128x128xf32, #tpu.memory_space<vmem>>, vector<128x128xf32>
    tpu.vector_store %arg5[%c0_11, %c0_12], %26 {strides = array<i32>} : memref<128x128xf32, #tpu.memory_space<vmem>>, vector<128x128xf32>,
    return
  }
  func.func @transform_0(%arg0: i32) -> (i32, i32) {
    %c0_i32 = arith.constant 0 : i32
    %c0_i32_0 = arith.constant 0 : i32
    return %arg0, %c0_i32 : i32, i32
  }
  func.func @transform_1(%arg0: i32) -> (i32, i32) {
    %c0_i32 = arith.constant 0 : i32
    %c0_i32_0 = arith.constant 0 : i32
    %c0_i32_1 = arith.constant 0 : i32
    return %c0_i32, %c0_i32_0 : i32, i32
  }
  func.func @transform_2(%arg0: i32) -> (i32, i32) {
    %c0_i32 = arith.constant 0 : i32
    %c0_i32_0 = arith.constant 0 : i32
    %c0_i32_1 = arith.constant 0 : i32
    return %c0_i32, %c0_i32_0 : i32, i32
  }
  func.func @transform_3(%arg0: i32) -> (i32, i32) {
    %c0_i32 = arith.constant 0 : i32
    %c0_i32_0 = arith.constant 0 : i32
    return %c0_i32, %arg0 : i32, i32
  }
  func.func @transform_4(%arg0: i32) -> (i32, i32) {
    %c0_i32 = arith.constant 0 : i32
    %c0_i32_0 = arith.constant 0 : i32
    return %c0_i32, %arg0 : i32, i32
  }
}

</mosaic_0001>

<llo_original>
// kernel: tpu_custom_call.1
$region0: #{tpu_custom_call.1}
  #allocation0 [shape = 'u32[]', space=smem, size = 0x4, offset = 0x4, fixed_abs, tag = 'smem constant byte address 0x4 - core index']
  #allocation1 [shape = 'u32[144,128]{1,0:T(1,128)}', space=vmem, size = 0x12000, scoped, tag = 'internal scratch']
  %s0 = inlined_call_operand.hbm [shape: f32[128,128], index: 0, kind: input, shape index: {}]
  %s1 = inlined_call_operand.hbm [shape: f32[128,256], index: 1, kind: input, shape index: {}]
  %s2 = inlined_call_operand.hbm [shape: f32[128,128], index: 2, kind: input, shape index: {}]
  %s3 = inlined_call_operand.hbm [shape: f32[128,128], index: 3, kind: output, shape index: {0}]
  %s4 = inlined_call_operand.hbm [shape: f32[128,128], index: 4, kind: output, shape index: {1}]
  %5 = xla_tuple %s3, %s4
  %s6 = sld [smem:[#allocation0]]
  $region42: #{tpu_custom_call.1} parent=0
    _
  %s8 = ssub.s32 1, %s6
  %s9 = scalar_select 0, %s8, %s6
  $region1: #{tpu_custom_call.1} parent=0
    #allocation2 [shape = 'u8[65536]{0}', space=vmem, size = 0x10000, scoped, tag = 'input window, operand 0, single buffered']
    #allocation3 [shape = 's32[1]{0}', space=sflag, size = 0x4, scoped, tag = 'scoped memory for tpu_custom_call.1']
    #allocation4 [shape = 's32[1]{0}', space=sflag, size = 0x4, scoped, tag = 'scoped memory for tpu_custom_call.1']
    #allocation5 [shape = 'u8[131072]{0}', space=vmem, size = 0x20000, scoped, tag = 'input window, operand 1, single buffered']
    #allocation6 [shape = 's32[1]{0}', space=sflag, size = 0x4, scoped, tag = 'scoped memory for tpu_custom_call.1']
    #allocation7 [shape = 'u8[65536]{0}', space=vmem, size = 0x10000, scoped, tag = 'input window, operand 2, single buffered']
    #allocation8 [shape = 'u8[65536]{0}', space=vmem, size = 0x10000, scoped, tag = 'output window, operand 0, single buffered']
    #allocation9 [shape = 'u8[65536]{0}', space=vmem, size = 0x10000, scoped, tag = 'output window, operand 1, single buffered']
    #allocation10 [shape = 's32[1]{0}', space=sflag, size = 0x4, scoped, tag = 'scoped memory for tpu_custom_call.1']
    %10 = vsyncpa [#allocation3], 0
    %11 = vsyncpa [#allocation6], 0
    %12 = vsyncpa [#allocation4], 0
    %13 = vsyncpa [#allocation10], 0
    // Predicated region
    $region2: #{tpu_custom_call.1} parent=1 // pred_check
      _
    $region3: #{tpu_custom_call.1} parent=1 // pred_check_branch
      %15 = sbr.rel (0) target = $region5
    $region4: #{tpu_custom_call.1} parent=1 // pred_region
      %s17 = ssub.s32 2048, 2048
      %18 = vsyncadd [#allocation3], %s17
      %s19 = sshll.u32 [#allocation2], 4
      %s20 = int_to_ptr.vmem [resolvable:$true] %s19
      %25 = dma.hbm_to_vmem [thread:$0]  %s0, 2048, %s20, [#allocation3], 128, 128, 8
    $region5: #{tpu_custom_call.1} parent=1 // pred_fallthru
      _
    // Predicated region
    $region6: #{tpu_custom_call.1} parent=1 // pred_check
      _
    $region7: #{tpu_custom_call.1} parent=1 // pred_check_branch
      %27 = sbr.rel (0) target = $region9
    $region8: #{tpu_custom_call.1} parent=1 // pred_region
      %s29 = ssub.s32 4096, 4096
      %30 = vsyncadd [#allocation6], %s29
      %s31 = sshll.u32 [#allocation5], 4
      %s32 = int_to_ptr.vmem [resolvable:$true] %s31
      %37 = dma.hbm_to_vmem [thread:$0]  %s1, 4096, %s32, [#allocation6], 256, 256, 16
    $region9: #{tpu_custom_call.1} parent=1 // pred_fallthru
      _
    // Predicated region
    $region10: #{tpu_custom_call.1} parent=1 // pred_check
      _
    $region11: #{tpu_custom_call.1} parent=1 // pred_check_branch
      %39 = sbr.rel (0) target = $region13
    $region12: #{tpu_custom_call.1} parent=1 // pred_region
      %s41 = ssub.s32 2048, 2048
      %42 = vsyncadd [#allocation6], %s41
      %s43 = sshll.u32 [#allocation7], 4
      %s44 = int_to_ptr.vmem [resolvable:$true] %s43
      %49 = dma.hbm_to_vmem [thread:$0]  %s2, 2048, %s44, [#allocation6], 128, 128, 8
    $region13: #{tpu_custom_call.1} parent=1 // pred_fallthru
      _
    // Predicated region
    $region14: #{tpu_custom_call.1} parent=1 // pred_check
      _
    $region15: #{tpu_custom_call.1} parent=1 // pred_check_branch
      %51 = sbr.rel (0) target = $region17
    $region16: #{tpu_custom_call.1} parent=1 // pred_region
      %52 = dma.done [#allocation3], 2048
    $region17: #{tpu_custom_call.1} parent=1 // pred_fallthru
      _
    // Predicated region
    $region18: #{tpu_custom_call.1} parent=1 // pred_check
      _
    $region19: #{tpu_custom_call.1} parent=1 // pred_check_branch
      %54 = sbr.rel (0) target = $region21
    $region20: #{tpu_custom_call.1} parent=1 // pred_region
      %55 = dma.done [#allocation6], 4096
    $region21: #{tpu_custom_call.1} parent=1 // pred_fallthru
      _
    // Predicated region
    $region22: #{tpu_custom_call.1} parent=1 // pred_check
      _
    $region23: #{tpu_custom_call.1} parent=1 // pred_check_branch
      %57 = sbr.rel (0) target = $region25
    $region24: #{tpu_custom_call.1} parent=1 // pred_region
      %58 = dma.done [#allocation6], 2048
    $region25: #{tpu_custom_call.1} parent=1 // pred_fallthru
      _
    %v59 = vld [vmem:[#allocation2] sm:$0xff]
    %v60 = vld [vmem:[#allocation2 + $0x8] sm:$0xff]
    %v61 = vld [vmem:[#allocation2 + $0x10] sm:$0xff]
    %v62 = vld [vmem:[#allocation2 + $0x18] sm:$0xff]
    %v63 = vld [vmem:[#allocation2 + $0x20] sm:$0xff]
    %v64 = vld [vmem:[#allocation2 + $0x28] sm:$0xff]
    %v65 = vld [vmem:[#allocation2 + $0x30] sm:$0xff]
    %v66 = vld [vmem:[#allocation2 + $0x38] sm:$0xff]
    %v67 = vld [vmem:[#allocation2 + $0x40] sm:$0xff]
    %v68 = vld [vmem:[#allocation2 + $0x48] sm:$0xff]
    %v69 = vld [vmem:[#allocation2 + $0x50] sm:$0xff]
    %v70 = vld [vmem:[#allocation2 + $0x58] sm:$0xff]
    %v71 = vld [vmem:[#allocation2 + $0x60] sm:$0xff]
    %v72 = vld [vmem:[#allocation2 + $0x68] sm:$0xff]
    %v73 = vld [vmem:[#allocation2 + $0x70] sm:$0xff]
    %v74 = vld [vmem:[#allocation2 + $0x78] sm:$0xff]
    %v75 = vld [vmem:[#allocation5] sm:$0xff]
    %v76 = vld [vmem:[#allocation5 + $0x8] sm:$0xff]
    %v77 = vld [vmem:[#allocation5 + $0x10] sm:$0xff]
    %v78 = vld [vmem:[#allocation5 + $0x18] sm:$0xff]
    %v79 = vld [vmem:[#allocation5 + $0x20] sm:$0xff]
    %v80 = vld [vmem:[#allocation5 + $0x28] sm:$0xff]
    %v81 = vld [vmem:[#allocation5 + $0x30] sm:$0xff]
    %v82 = vld [vmem:[#allocation5 + $0x38] sm:$0xff]
    %v83 = vld [vmem:[#allocation5 + $0x40] sm:$0xff]
    %v84 = vld [vmem:[#allocation5 + $0x48] sm:$0xff]
    %v85 = vld [vmem:[#allocation5 + $0x50] sm:$0xff]
    %v86 = vld [vmem:[#allocation5 + $0x58] sm:$0xff]
    %v87 = vld [vmem:[#allocation5 + $0x60] sm:$0xff]
    %v88 = vld [vmem:[#allocation5 + $0x68] sm:$0xff]
    %v89 = vld [vmem:[#allocation5 + $0x70] sm:$0xff]
    %v90 = vld [vmem:[#allocation5 + $0x78] sm:$0xff]
    %v91 = vld [vmem:[#allocation5 + $0x80] sm:$0xff]
    %v92 = vld [vmem:[#allocation5 + $0x88] sm:$0xff]
    %v93 = vld [vmem:[#allocation5 + $0x90] sm:$0xff]
    %v94 = vld [vmem:[#allocation5 + $0x98] sm:$0xff]
    %v95 = vld [vmem:[#allocation5 + $0xa0] sm:$0xff]
    %v96 = vld [vmem:[#allocation5 + $0xa8] sm:$0xff]
    %v97 = vld [vmem:[#allocation5 + $0xb0] sm:$0xff]
    %v98 = vld [vmem:[#allocation5 + $0xb8] sm:$0xff]
    %v99 = vld [vmem:[#allocation5 + $0xc0] sm:$0xff]
    %v100 = vld [vmem:[#allocation5 + $0xc8] sm:$0xff]
    %v101 = vld [vmem:[#allocation5 + $0xd0] sm:$0xff]
    %v102 = vld [vmem:[#allocation5 + $0xd8] sm:$0xff]
    %v103 = vld [vmem:[#allocation5 + $0xe0] sm:$0xff]
    %v104 = vld [vmem:[#allocation5 + $0xe8] sm:$0xff]
    %v105 = vld [vmem:[#allocation5 + $0xf0] sm:$0xff]
    %v106 = vld [vmem:[#allocation5 + $0xf8] sm:$0xff]
    %107 = vmatprep.subr.mxu0 %v76
    %108 = vmatpush1.msra.mxu0 %v75
    %109 = vmatprep.subr.mxu0 %v78
    %110 = vmatpush1.msra.mxu0 %v77
    %111 = vmatprep.subr.mxu0 %v80
    %112 = vmatpush1.msra.mxu0 %v79
    %113 = vmatprep.subr.mxu0 %v82
    %114 = vmatpush1.msra.mxu0 %v81
    %115 = vmatprep.subr.mxu0 %v84
    %116 = vmatpush1.msra.mxu0 %v83
    %117 = vmatprep.subr.mxu0 %v86
    %118 = vmatpush1.msra.mxu0 %v85
    %119 = vmatprep.subr.mxu0 %v88
    %120 = vmatpush1.msra.mxu0 %v87
    %121 = vmatprep.subr.mxu0 %v90
    %122 = vmatpush1.msra.mxu0 %v89
    %123 = vmatprep.subr.mxu0 %v92
    %124 = vmatpush1.msra.mxu0 %v91
    %125 = vmatprep.subr.mxu0 %v94
    %126 = vmatpush1.msra.mxu0 %v93
    %127 = vmatprep.subr.mxu0 %v96
    %128 = vmatpush1.msra.mxu0 %v95
    %129 = vmatprep.subr.mxu0 %v98
    %130 = vmatpush1.msra.mxu0 %v97
    %131 = vmatprep.subr.mxu0 %v100
    %132 = vmatpush1.msra.mxu0 %v99
    %133 = vmatprep.subr.mxu0 %v102
    %134 = vmatpush1.msra.mxu0 %v101
    %135 = vmatprep.subr.mxu0 %v104
    %136 = vmatpush1.msra.mxu0 %v103
    %137 = vmatprep.subr.mxu0 %v106
    %138 = vmatpush1.msra.mxu0 %v105
    %139 = vmatprep.subr.mxu0 0.0
    %140 = vmatpush1.msra.mxu0 0.0
    %141 = vmatprep.subr.mxu0 0.0
    %142 = vmatpush1.msra.mxu0 0.0
    %143 = vmatprep.subr.mxu0 0.0
    %144 = vmatpush1.msra.mxu0 0.0
    %145 = vmatprep.subr.mxu0 0.0
    %146 = vmatpush1.msra.mxu0 0.0
    %147 = vmatprep.subr.mxu0 0.0
    %148 = vmatpush1.msra.mxu0 0.0
    %149 = vmatprep.subr.mxu0 0.0
    %150 = vmatpush1.msra.mxu0 0.0
    %151 = vmatprep.subr.mxu0 0.0
    %152 = vmatpush1.msra.mxu0 0.0
    %153 = vmatprep.subr.mxu0 0.0
    %154 = vmatpush1.msra.mxu0 0.0
    %155 = vmatprep.subr.mxu0 0.0
    %156 = vmatpush1.msra.mxu0 0.0
    %157 = vmatprep.subr.mxu0 0.0
    %158 = vmatpush1.msra.mxu0 0.0
    %159 = vmatprep.subr.mxu0 0.0
    %160 = vmatpush1.msra.mxu0 0.0
    %161 = vmatprep.subr.mxu0 0.0
    %162 = vmatpush1.msra.mxu0 0.0
    %163 = vmatprep.subr.mxu0 0.0
    %164 = vmatpush1.msra.mxu0 0.0
    %165 = vmatprep.subr.mxu0 0.0
    %166 = vmatpush1.msra.mxu0 0.0
    %167 = vmatprep.subr.mxu0 0.0
    %168 = vmatpush1.msra.mxu0 0.0
    %169 = vmatprep.subr.mxu0 0.0
    %170 = vmatpush1.msra.mxu0 0.0
    %171 = vmatprep.mubr.f32.mxu0 0.0
    %172 = vmatmul.mubr.f32.gmra.mrb[0].mxu0 %v59
    %v173 = vpop.f32.mrb[0].mxu0
    %v174 = vadd.f32 0.0, %v173
    %v175 = vpop.f32.mrb[0].mxu0
    %v176 = vadd.f32 0.0, %v175
    %177 = vmatprep.mubr.f32.mxu0 0.0
    %178 = vmatmul.mubr.f32.gmra.mrb[0].mxu0 %v60
    %v179 = vpop.f32.mrb[0].mxu0
    %v180 = vadd.f32 0.0, %v179
    %v181 = vpop.f32.mrb[0].mxu0
    %v182 = vadd.f32 0.0, %v181
    %183 = vmatprep.mubr.f32.mxu0 0.0
    %184 = vmatmul.mubr.f32.gmra.mrb[0].mxu0 %v61
    %v185 = vpop.f32.mrb[0].mxu0
    %v186 = vadd.f32 0.0, %v185
    %v187 = vpop.f32.mrb[0].mxu0
    %v188 = vadd.f32 0.0, %v187
    %189 = vmatprep.mubr.f32.mxu0 0.0
    %190 = vmatmul.mubr.f32.gmra.mrb[0].mxu0 %v62
    %v191 = vpop.f32.mrb[0].mxu0
    %v192 = vadd.f32 0.0, %v191
    %v193 = vpop.f32.mrb[0].mxu0
    %v194 = vadd.f32 0.0, %v193
    %195 = vmatprep.mubr.f32.mxu0 0.0
    %196 = vmatmul.mubr.f32.gmra.mrb[0].mxu0 %v63
    %v197 = vpop.f32.mrb[0].mxu0
    %v198 = vadd.f32 0.0, %v197
    %v199 = vpop.f32.mrb[0].mxu0
    %v200 = vadd.f32 0.0, %v199
    %201 = vmatprep.mubr.f32.mxu0 0.0
    %202 = vmatmul.mubr.f32.gmra.mrb[0].mxu0 %v64
    %v203 = vpop.f32.mrb[0].mxu0
    %v204 = vadd.f32 0.0, %v203
    %v205 = vpop.f32.mrb[0].mxu0
    %v206 = vadd.f32 0.0, %v205
    %207 = vmatprep.mubr.f32.mxu0 0.0
    %208 = vmatmul.mubr.f32.gmra.mrb[0].mxu0 %v65
    %v209 = vpop.f32.mrb[0].mxu0
    %v210 = vadd.f32 0.0, %v209
    %v211 = vpop.f32.mrb[0].mxu0
    %v212 = vadd.f32 0.0, %v211
    %213 = vmatprep.mubr.f32.mxu0 0.0
    %214 = vmatmul.mubr.f32.gmra.mrb[0].mxu0 %v66
    %v215 = vpop.f32.mrb[0].mxu0
    %v216 = vadd.f32 0.0, %v215
    %v217 = vpop.f32.mrb[0].mxu0
    %v218 = vadd.f32 0.0, %v217
    %219 = vmatprep.mubr.f32.mxu0 0.0
    %220 = vmatmul.mubr.f32.gmra.mrb[0].mxu0 %v67
    %v221 = vpop.f32.mrb[0].mxu0
    %v222 = vadd.f32 0.0, %v221
    %v223 = vpop.f32.mrb[0].mxu0
    %v224 = vadd.f32 0.0, %v223
    %225 = vmatprep.mubr.f32.mxu0 0.0
    %226 = vmatmul.mubr.f32.gmra.mrb[0].mxu0 %v68
    %v227 = vpop.f32.mrb[0].mxu0
    %v228 = vadd.f32 0.0, %v227
    %v229 = vpop.f32.mrb[0].mxu0
    %v230 = vadd.f32 0.0, %v229
    %231 = vmatprep.mubr.f32.mxu0 0.0
    %232 = vmatmul.mubr.f32.gmra.mrb[0].mxu0 %v69
    %v233 = vpop.f32.mrb[0].mxu0
    %v234 = vadd.f32 0.0, %v233
    %v235 = vpop.f32.mrb[0].mxu0
    %v236 = vadd.f32 0.0, %v235
    %237 = vmatprep.mubr.f32.mxu0 0.0
    %238 = vmatmul.mubr.f32.gmra.mrb[0].mxu0 %v70
    %v239 = vpop.f32.mrb[0].mxu0
    %v240 = vadd.f32 0.0, %v239
    %v241 = vpop.f32.mrb[0].mxu0
    %v242 = vadd.f32 0.0, %v241
    %243 = vmatprep.mubr.f32.mxu0 0.0
    %244 = vmatmul.mubr.f32.gmra.mrb[0].mxu0 %v71
    %v245 = vpop.f32.mrb[0].mxu0
    %v246 = vadd.f32 0.0, %v245
    %v247 = vpop.f32.mrb[0].mxu0
    %v248 = vadd.f32 0.0, %v247
    %249 = vmatprep.mubr.f32.mxu0 0.0
    %250 = vmatmul.mubr.f32.gmra.mrb[0].mxu0 %v72
    %v251 = vpop.f32.mrb[0].mxu0
    %v252 = vadd.f32 0.0, %v251
    %v253 = vpop.f32.mrb[0].mxu0
    %v254 = vadd.f32 0.0, %v253
    %255 = vmatprep.mubr.f32.mxu0 0.0
    %256 = vmatmul.mubr.f32.gmra.mrb[0].mxu0 %v73
    %v257 = vpop.f32.mrb[0].mxu0
    %v258 = vadd.f32 0.0, %v257
    %v259 = vpop.f32.mrb[0].mxu0
    %v260 = vadd.f32 0.0, %v259
    %261 = vmatprep.mubr.f32.mxu0 0.0
    %262 = vmatmul.mubr.f32.gmra.mrb[0].mxu0 %v74
    %v263 = vpop.f32.mrb[0].mxu0
    %v264 = vadd.f32 0.0, %v263
    %v265 = vpop.f32.mrb[0].mxu0
    %v266 = vadd.f32 0.0, %v265
    %267 = vdwg.mxu0
    %v268 = vmul.f32 %v174, %v174
    %v269 = vmul.f32 %v180, %v180
    %v270 = vmul.f32 %v186, %v186
    %v271 = vmul.f32 %v192, %v192
    %v272 = vmul.f32 %v198, %v198
    %v273 = vmul.f32 %v204, %v204
    %v274 = vmul.f32 %v210, %v210
    %v275 = vmul.f32 %v216, %v216
    %v276 = vmul.f32 %v222, %v222
    %v277 = vmul.f32 %v228, %v228
    %v278 = vmul.f32 %v234, %v234
    %v279 = vmul.f32 %v240, %v240
    %v280 = vmul.f32 %v246, %v246
    %v281 = vmul.f32 %v252, %v252
    %v282 = vmul.f32 %v258, %v258
    %v283 = vmul.f32 %v264, %v264
    %v284 = vmul.f32 %v176, %v176
    %v285 = vmul.f32 %v182, %v182
    %v286 = vmul.f32 %v188, %v188
    %v287 = vmul.f32 %v194, %v194
    %v288 = vmul.f32 %v200, %v200
    %v289 = vmul.f32 %v206, %v206
    %v290 = vmul.f32 %v212, %v212
    %v291 = vmul.f32 %v218, %v218
    %v292 = vmul.f32 %v224, %v224
    %v293 = vmul.f32 %v230, %v230
    %v294 = vmul.f32 %v236, %v236
    %v295 = vmul.f32 %v242, %v242
    %v296 = vmul.f32 %v248, %v248
    %v297 = vmul.f32 %v254, %v254
    %v298 = vmul.f32 %v260, %v260
    %v299 = vmul.f32 %v266, %v266
    %v300 = vadd.f32 %v268, %v284
    %v301 = vadd.f32 %v269, %v285
    %v302 = vadd.f32 %v270, %v286
    %v303 = vadd.f32 %v271, %v287
    %v304 = vadd.f32 %v272, %v288
    %v305 = vadd.f32 %v273, %v289
    %v306 = vadd.f32 %v274, %v290
    %v307 = vadd.f32 %v275, %v291
    %v308 = vadd.f32 %v276, %v292
    %v309 = vadd.f32 %v277, %v293
    %v310 = vadd.f32 %v278, %v294
    %v311 = vadd.f32 %v279, %v295
    %v312 = vadd.f32 %v280, %v296
    %v313 = vadd.f32 %v281, %v297
    %v314 = vadd.f32 %v282, %v298
    %v315 = vadd.f32 %v283, %v299
    %316 = vxpose.xlu0.b32.start [1/16] %v300, 128
    %317 = vxpose.xlu0.b32.cont [2/16] %v301, 128
    %318 = vxpose.xlu0.b32.cont [3/16] %v302, 128
    %319 = vxpose.xlu0.b32.cont [4/16] %v303, 128
    %320 = vxpose.xlu0.b32.cont [5/16] %v304, 128
    %321 = vxpose.xlu0.b32.cont [6/16] %v305, 128
    %322 = vxpose.xlu0.b32.cont [7/16] %v306, 128
    %323 = vxpose.xlu0.b32.cont [8/16] %v307, 128
    %324 = vxpose.xlu0.b32.cont [9/16] %v308, 128
    %325 = vxpose.xlu0.b32.cont [10/16] %v309, 128
    %326 = vxpose.xlu0.b32.cont [11/16] %v310, 128
    %327 = vxpose.xlu0.b32.cont [12/16] %v311, 128
    %328 = vxpose.xlu0.b32.cont [13/16] %v312, 128
    %329 = vxpose.xlu0.b32.cont [14/16] %v313, 128
    %330 = vxpose.xlu0.b32.cont [15/16] %v314, 128
    %331 = vxpose.xlu0.b32.end [16/16] %v315, 128
    %v332 = vpop.trf.xlu0
    %v333 = vpop.trf.xlu0
    %v334 = vpop.trf.xlu0
    %v335 = vpop.trf.xlu0
    %v336 = vpop.trf.xlu0
    %v337 = vpop.trf.xlu0
    %v338 = vpop.trf.xlu0
    %v339 = vpop.trf.xlu0
    %v340 = vpop.trf.xlu0
    %v341 = vpop.trf.xlu0
    %v342 = vpop.trf.xlu0
    %v343 = vpop.trf.xlu0
    %v344 = vpop.trf.xlu0
    %v345 = vpop.trf.xlu0
    %v346 = vpop.trf.xlu0
    %v347 = vpop.trf.xlu0
    %v348 = vrsqrt.pop %v332
    %v349 = vmul.f32 %v332, %v348
    %vm350 = vcmp.eq.f32.partialorder %v332, inf
    %v351 = vsel %vm350, %v332, %v349
    %vm352 = vcmp.eq.f32.partialorder %v332, 0.0
    %v353 = vand.u32 %v332, 2147483648
    %v354 = vsel %vm352, %v353, %v351
    %v355 = vrsqrt.pop %v333
    %v356 = vmul.f32 %v333, %v355
    %vm357 = vcmp.eq.f32.partialorder %v333, inf
    %v358 = vsel %vm357, %v333, %v356
    %vm359 = vcmp.eq.f32.partialorder %v333, 0.0
    %v360 = vand.u32 %v333, 2147483648
    %v361 = vsel %vm359, %v360, %v358
    %v362 = vrsqrt.pop %v334
    %v363 = vmul.f32 %v334, %v362
    %vm364 = vcmp.eq.f32.partialorder %v334, inf
    %v365 = vsel %vm364, %v334, %v363
    %vm366 = vcmp.eq.f32.partialorder %v334, 0.0
    %v367 = vand.u32 %v334, 2147483648
    %v368 = vsel %vm366, %v367, %v365
    %v369 = vrsqrt.pop %v335
    %v370 = vmul.f32 %v335, %v369
    %vm371 = vcmp.eq.f32.partialorder %v335, inf
    %v372 = vsel %vm371, %v335, %v370
    %vm373 = vcmp.eq.f32.partialorder %v335, 0.0
    %v374 = vand.u32 %v335, 2147483648
    %v375 = vsel %vm373, %v374, %v372
    %v376 = vrsqrt.pop %v336
    %v377 = vmul.f32 %v336, %v376
    %vm378 = vcmp.eq.f32.partialorder %v336, inf
    %v379 = vsel %vm378, %v336, %v377
    %vm380 = vcmp.eq.f32.partialorder %v336, 0.0
    %v381 = vand.u32 %v336, 2147483648
    %v382 = vsel %vm380, %v381, %v379
    %v383 = vrsqrt.pop %v337
    %v384 = vmul.f32 %v337, %v383
    %vm385 = vcmp.eq.f32.partialorder %v337, inf
    %v386 = vsel %vm385, %v337, %v384
    %vm387 = vcmp.eq.f32.partialorder %v337, 0.0
    %v388 = vand.u32 %v337, 2147483648
    %v389 = vsel %vm387, %v388, %v386
    %v390 = vrsqrt.pop %v338
    %v391 = vmul.f32 %v338, %v390
    %vm392 = vcmp.eq.f32.partialorder %v338, inf
    %v393 = vsel %vm392, %v338, %v391
    %vm394 = vcmp.eq.f32.partialorder %v338, 0.0
    %v395 = vand.u32 %v338, 2147483648
    %v396 = vsel %vm394, %v395, %v393
    %v397 = vrsqrt.pop %v339
    %v398 = vmul.f32 %v339, %v397
    %vm399 = vcmp.eq.f32.partialorder %v339, inf
    %v400 = vsel %vm399, %v339, %v398
    %vm401 = vcmp.eq.f32.partialorder %v339, 0.0
    %v402 = vand.u32 %v339, 2147483648
    %v403 = vsel %vm401, %v402, %v400
    %v404 = vrsqrt.pop %v340
    %v405 = vmul.f32 %v340, %v404
    %vm406 = vcmp.eq.f32.partialorder %v340, inf
    %v407 = vsel %vm406, %v340, %v405
    %vm408 = vcmp.eq.f32.partialorder %v340, 0.0
    %v409 = vand.u32 %v340, 2147483648
    %v410 = vsel %vm408, %v409, %v407
    %v411 = vrsqrt.pop %v341
    %v412 = vmul.f32 %v341, %v411
    %vm413 = vcmp.eq.f32.partialorder %v341, inf
    %v414 = vsel %vm413, %v341, %v412
    %vm415 = vcmp.eq.f32.partialorder %v341, 0.0
    %v416 = vand.u32 %v341, 2147483648
    %v417 = vsel %vm415, %v416, %v414
    %v418 = vrsqrt.pop %v342
    %v419 = vmul.f32 %v342, %v418
    %vm420 = vcmp.eq.f32.partialorder %v342, inf
    %v421 = vsel %vm420, %v342, %v419
    %vm422 = vcmp.eq.f32.partialorder %v342, 0.0
    %v423 = vand.u32 %v342, 2147483648
    %v424 = vsel %vm422, %v423, %v421
    %v425 = vrsqrt.pop %v343
    %v426 = vmul.f32 %v343, %v425
    %vm427 = vcmp.eq.f32.partialorder %v343, inf
    %v428 = vsel %vm427, %v343, %v426
    %vm429 = vcmp.eq.f32.partialorder %v343, 0.0
    %v430 = vand.u32 %v343, 2147483648
    %v431 = vsel %vm429, %v430, %v428
    %v432 = vrsqrt.pop %v344
    %v433 = vmul.f32 %v344, %v432
    %vm434 = vcmp.eq.f32.partialorder %v344, inf
    %v435 = vsel %vm434, %v344, %v433
    %vm436 = vcmp.eq.f32.partialorder %v344, 0.0
    %v437 = vand.u32 %v344, 2147483648
    %v438 = vsel %vm436, %v437, %v435
    %v439 = vrsqrt.pop %v345
    %v440 = vmul.f32 %v345, %v439
    %vm441 = vcmp.eq.f32.partialorder %v345, inf
    %v442 = vsel %vm441, %v345, %v440
    %vm443 = vcmp.eq.f32.partialorder %v345, 0.0
    %v444 = vand.u32 %v345, 2147483648
    %v445 = vsel %vm443, %v444, %v442
    %v446 = vrsqrt.pop %v346
    %v447 = vmul.f32 %v346, %v446
    %vm448 = vcmp.eq.f32.partialorder %v346, inf
    %v449 = vsel %vm448, %v346, %v447
    %vm450 = vcmp.eq.f32.partialorder %v346, 0.0
    %v451 = vand.u32 %v346, 2147483648
    %v452 = vsel %vm450, %v451, %v449
    %v453 = vrsqrt.pop %v347
    %v454 = vmul.f32 %v347, %v453
    %vm455 = vcmp.eq.f32.partialorder %v347, inf
    %v456 = vsel %vm455, %v347, %v454
    %vm457 = vcmp.eq.f32.partialorder %v347, 0.0
    %v458 = vand.u32 %v347, 2147483648
    %v459 = vsel %vm457, %v458, %v456
    %460 = vst [vmem:[#allocation8] sm:$0xff] %v354
    %461 = vst [vmem:[#allocation8 + $0x8] sm:$0xff] %v361
    %462 = vst [vmem:[#allocation8 + $0x10] sm:$0xff] %v368
    %463 = vst [vmem:[#allocation8 + $0x18] sm:$0xff] %v375
    %464 = vst [vmem:[#allocation8 + $0x20] sm:$0xff] %v382
    %465 = vst [vmem:[#allocation8 + $0x28] sm:$0xff] %v389
    %466 = vst [vmem:[#allocation8 + $0x30] sm:$0xff] %v396
    %467 = vst [vmem:[#allocation8 + $0x38] sm:$0xff] %v403
    %468 = vst [vmem:[#allocation8 + $0x40] sm:$0xff] %v410
    %469 = vst [vmem:[#allocation8 + $0x48] sm:$0xff] %v417
    %470 = vst [vmem:[#allocation8 + $0x50] sm:$0xff] %v424
    %471 = vst [vmem:[#allocation8 + $0x58] sm:$0xff] %v431
    %472 = vst [vmem:[#allocation8 + $0x60] sm:$0xff] %v438
    %473 = vst [vmem:[#allocation8 + $0x68] sm:$0xff] %v445
    %474 = vst [vmem:[#allocation8 + $0x70] sm:$0xff] %v452
    %475 = vst [vmem:[#allocation8 + $0x78] sm:$0xff] %v459
    %v476 = vadd.f32 %v332, %v333
    %v477 = vadd.f32 %v476, %v334
    %v478 = vadd.f32 %v477, %v335
    %v479 = vadd.f32 %v478, %v336
    %v480 = vadd.f32 %v479, %v337
    %v481 = vadd.f32 %v480, %v338
    %v482 = vadd.f32 %v481, %v339
    %v483 = vadd.f32 %v482, %v340
    %v484 = vadd.f32 %v483, %v341
    %v485 = vadd.f32 %v484, %v342
    %v486 = vadd.f32 %v485, %v343
    %v487 = vadd.f32 %v486, %v344
    %v488 = vadd.f32 %v487, %v345
    %v489 = vadd.f32 %v488, %v346
    %v490 = vadd.f32 %v489, %v347
    %v491 = vrot.slane %v490, 4
    %v492 = vadd.f32 %v490, %v491
    %v493 = vrot.slane %v492, 2
    %v494 = vadd.f32 %v492, %v493
    %v495 = vrot.slane %v494, 1
    %v496 = vadd.f32 %v494, %v495
    %v497 = vrsqrt.pop %v496
    %v498 = vmul.f32 %v496, %v497
    %vm499 = vcmp.eq.f32.partialorder %v496, inf
    %v500 = vsel %vm499, %v496, %v498
    %vm501 = vcmp.eq.f32.partialorder %v496, 0.0
    %v502 = vand.u32 %v496, 2147483648
    %v503 = vsel %vm501, %v502, %v500
    %v504 = vld [vmem:[#allocation7] sm:$0xff]
    %v505 = vld [vmem:[#allocation7 + $0x8] sm:$0xff]
    %v506 = vld [vmem:[#allocation7 + $0x10] sm:$0xff]
    %v507 = vld [vmem:[#allocation7 + $0x18] sm:$0xff]
    %v508 = vld [vmem:[#allocation7 + $0x20] sm:$0xff]
    %v509 = vld [vmem:[#allocation7 + $0x28] sm:$0xff]
    %v510 = vld [vmem:[#allocation7 + $0x30] sm:$0xff]
    %v511 = vld [vmem:[#allocation7 + $0x38] sm:$0xff]
    %v512 = vld [vmem:[#allocation7 + $0x40] sm:$0xff]
    %v513 = vld [vmem:[#allocation7 + $0x48] sm:$0xff]
    %v514 = vld [vmem:[#allocation7 + $0x50] sm:$0xff]
    %v515 = vld [vmem:[#allocation7 + $0x58] sm:$0xff]
    %v516 = vld [vmem:[#allocation7 + $0x60] sm:$0xff]
    %v517 = vld [vmem:[#allocation7 + $0x68] sm:$0xff]
    %v518 = vld [vmem:[#allocation7 + $0x70] sm:$0xff]
    %v519 = vld [vmem:[#allocation7 + $0x78] sm:$0xff]
    %520 = vmatprep.subr.mxu0 0.0
    %521 = vmatpush1.msra.mxu0 %v354
    %522 = vmatprep.subr.mxu0 0.0
    %523 = vmatpush1.msra.mxu0 %v361
    %524 = vmatprep.subr.mxu0 0.0
    %525 = vmatpush1.msra.mxu0 %v368
    %526 = vmatprep.subr.mxu0 0.0
    %527 = vmatpush1.msra.mxu0 %v375
    %528 = vmatprep.subr.mxu0 0.0
    %529 = vmatpush1.msra.mxu0 %v382
    %530 = vmatprep.subr.mxu0 0.0
    %531 = vmatpush1.msra.mxu0 %v389
    %532 = vmatprep.subr.mxu0 0.0
    %533 = vmatpush1.msra.mxu0 %v396
    %534 = vmatprep.subr.mxu0 0.0
    %535 = vmatpush1.msra.mxu0 %v403
    %536 = vmatprep.subr.mxu0 0.0
    %537 = vmatpush1.msra.mxu0 %v410
    %538 = vmatprep.subr.mxu0 0.0
    %539 = vmatpush1.msra.mxu0 %v417
    %540 = vmatprep.subr.mxu0 0.0
    %541 = vmatpush1.msra.mxu0 %v424
    %542 = vmatprep.subr.mxu0 0.0
    %543 = vmatpush1.msra.mxu0 %v431
    %544 = vmatprep.subr.mxu0 0.0
    %545 = vmatpush1.msra.mxu0 %v438
    %546 = vmatprep.subr.mxu0 0.0
    %547 = vmatpush1.msra.mxu0 %v445
    %548 = vmatprep.subr.mxu0 0.0
    %549 = vmatpush1.msra.mxu0 %v452
    %550 = vmatprep.subr.mxu0 0.0
    %551 = vmatpush1.msra.mxu0 %v459
    %552 = vmatprep.subr.mxu0 0.0
    %553 = vmatpush1.msra.mxu0 0.0
    %554 = vmatprep.subr.mxu0 0.0
    %555 = vmatpush1.msra.mxu0 0.0
    %556 = vmatprep.subr.mxu0 0.0
    %557 = vmatpush1.msra.mxu0 0.0
    %558 = vmatprep.subr.mxu0 0.0
    %559 = vmatpush1.msra.mxu0 0.0
    %560 = vmatprep.subr.mxu0 0.0
    %561 = vmatpush1.msra.mxu0 0.0
    %562 = vmatprep.subr.mxu0 0.0
    %563 = vmatpush1.msra.mxu0 0.0
    %564 = vmatprep.subr.mxu0 0.0
    %565 = vmatpush1.msra.mxu0 0.0
    %566 = vmatprep.subr.mxu0 0.0
    %567 = vmatpush1.msra.mxu0 0.0
    %568 = vmatprep.subr.mxu0 0.0
    %569 = vmatpush1.msra.mxu0 0.0
    %570 = vmatprep.subr.mxu0 0.0
    %571 = vmatpush1.msra.mxu0 0.0
    %572 = vmatprep.subr.mxu0 0.0
    %573 = vmatpush1.msra.mxu0 0.0
    %574 = vmatprep.subr.mxu0 0.0
    %575 = vmatpush1.msra.mxu0 0.0
    %576 = vmatprep.subr.mxu0 0.0
    %577 = vmatpush1.msra.mxu0 0.0
    %578 = vmatprep.subr.mxu0 0.0
    %579 = vmatpush1.msra.mxu0 0.0
    %580 = vmatprep.subr.mxu0 0.0
    %581 = vmatpush1.msra.mxu0 0.0
    %582 = vmatprep.subr.mxu0 0.0
    %583 = vmatpush1.msra.mxu0 0.0
    %584 = vmatprep.mubr.f32.mxu0 0.0
    %585 = vmatmul.mubr.f32.gmra.mrb[0].mxu0 %v504
    %v586 = vpop.f32.mrb[0].mxu0
    %v587 = vadd.f32 0.0, %v586
    %v588 = vpop.f32.mrb[0].mxu0
    %589 = vmatprep.mubr.f32.mxu0 0.0
    %590 = vmatmul.mubr.f32.gmra.mrb[0].mxu0 %v505
    %v591 = vpop.f32.mrb[0].mxu0
    %v592 = vadd.f32 0.0, %v591
    %v593 = vpop.f32.mrb[0].mxu0
    %594 = vmatprep.mubr.f32.mxu0 0.0
    %595 = vmatmul.mubr.f32.gmra.mrb[0].mxu0 %v506
    %v596 = vpop.f32.mrb[0].mxu0
    %v597 = vadd.f32 0.0, %v596
    %v598 = vpop.f32.mrb[0].mxu0
    %599 = vmatprep.mubr.f32.mxu0 0.0
    %600 = vmatmul.mubr.f32.gmra.mrb[0].mxu0 %v507
    %v601 = vpop.f32.mrb[0].mxu0
    %v602 = vadd.f32 0.0, %v601
    %v603 = vpop.f32.mrb[0].mxu0
    %604 = vmatprep.mubr.f32.mxu0 0.0
    %605 = vmatmul.mubr.f32.gmra.mrb[0].mxu0 %v508
    %v606 = vpop.f32.mrb[0].mxu0
    %v607 = vadd.f32 0.0, %v606
    %v608 = vpop.f32.mrb[0].mxu0
    %609 = vmatprep.mubr.f32.mxu0 0.0
    %610 = vmatmul.mubr.f32.gmra.mrb[0].mxu0 %v509
    %v611 = vpop.f32.mrb[0].mxu0
    %v612 = vadd.f32 0.0, %v611
    %v613 = vpop.f32.mrb[0].mxu0
    %614 = vmatprep.mubr.f32.mxu0 0.0
    %615 = vmatmul.mubr.f32.gmra.mrb[0].mxu0 %v510
    %v616 = vpop.f32.mrb[0].mxu0
    %v617 = vadd.f32 0.0, %v616
    %v618 = vpop.f32.mrb[0].mxu0
    %619 = vmatprep.mubr.f32.mxu0 0.0
    %620 = vmatmul.mubr.f32.gmra.mrb[0].mxu0 %v511
    %v621 = vpop.f32.mrb[0].mxu0
    %v622 = vadd.f32 0.0, %v621
    %v623 = vpop.f32.mrb[0].mxu0
    %624 = vmatprep.mubr.f32.mxu0 0.0
    %625 = vmatmul.mubr.f32.gmra.mrb[0].mxu0 %v512
    %v626 = vpop.f32.mrb[0].mxu0
    %v627 = vadd.f32 0.0, %v626
    %v628 = vpop.f32.mrb[0].mxu0
    %629 = vmatprep.mubr.f32.mxu0 0.0
    %630 = vmatmul.mubr.f32.gmra.mrb[0].mxu0 %v513
    %v631 = vpop.f32.mrb[0].mxu0
    %v632 = vadd.f32 0.0, %v631
    %v633 = vpop.f32.mrb[0].mxu0
    %634 = vmatprep.mubr.f32.mxu0 0.0
    %635 = vmatmul.mubr.f32.gmra.mrb[0].mxu0 %v514
    %v636 = vpop.f32.mrb[0].mxu0
    %v637 = vadd.f32 0.0, %v636
    %v638 = vpop.f32.mrb[0].mxu0
    %639 = vmatprep.mubr.f32.mxu0 0.0
    %640 = vmatmul.mubr.f32.gmra.mrb[0].mxu0 %v515
    %v641 = vpop.f32.mrb[0].mxu0
    %v642 = vadd.f32 0.0, %v641
    %v643 = vpop.f32.mrb[0].mxu0
    %644 = vmatprep.mubr.f32.mxu0 0.0
    %645 = vmatmul.mubr.f32.gmra.mrb[0].mxu0 %v516
    %v646 = vpop.f32.mrb[0].mxu0
    %v647 = vadd.f32 0.0, %v646
    %v648 = vpop.f32.mrb[0].mxu0
    %649 = vmatprep.mubr.f32.mxu0 0.0
    %650 = vmatmul.mubr.f32.gmra.mrb[0].mxu0 %v517
    %v651 = vpop.f32.mrb[0].mxu0
    %v652 = vadd.f32 0.0, %v651
    %v653 = vpop.f32.mrb[0].mxu0
    %654 = vmatprep.mubr.f32.mxu0 0.0
    %655 = vmatmul.mubr.f32.gmra.mrb[0].mxu0 %v518
    %v656 = vpop.f32.mrb[0].mxu0
    %v657 = vadd.f32 0.0, %v656
    %v658 = vpop.f32.mrb[0].mxu0
    %659 = vmatprep.mubr.f32.mxu0 0.0
    %660 = vmatmul.mubr.f32.gmra.mrb[0].mxu0 %v519
    %v661 = vpop.f32.mrb[0].mxu0
    %v662 = vadd.f32 0.0, %v661
    %v663 = vpop.f32.mrb[0].mxu0
    %664 = vdwg.mxu0
    %v665 = vmax.f32 %v587, 1e-05
    %v666 = vmax.f32 %v592, 1e-05
    %v667 = vmax.f32 %v597, 1e-05
    %v668 = vmax.f32 %v602, 1e-05
    %v669 = vmax.f32 %v607, 1e-05
    %v670 = vmax.f32 %v612, 1e-05
    %v671 = vmax.f32 %v617, 1e-05
    %v672 = vmax.f32 %v622, 1e-05
    %v673 = vmax.f32 %v627, 1e-05
    %v674 = vmax.f32 %v632, 1e-05
    %v675 = vmax.f32 %v637, 1e-05
    %v676 = vmax.f32 %v642, 1e-05
    %v677 = vmax.f32 %v647, 1e-05
    %v678 = vmax.f32 %v652, 1e-05
    %v679 = vmax.f32 %v657, 1e-05
    %v680 = vmax.f32 %v662, 1e-05
    %v681 = vlog2.pop %v665
    %v682 = vmul.f32 %v681, 0.6931472
    %v683 = vlog2.pop %v666
    %v684 = vmul.f32 %v683, 0.6931472
    %v685 = vlog2.pop %v667
    %v686 = vmul.f32 %v685, 0.6931472
    %v687 = vlog2.pop %v668
    %v688 = vmul.f32 %v687, 0.6931472
    %v689 = vlog2.pop %v669
    %v690 = vmul.f32 %v689, 0.6931472
    %v691 = vlog2.pop %v670
    %v692 = vmul.f32 %v691, 0.6931472
    %v693 = vlog2.pop %v671
    %v694 = vmul.f32 %v693, 0.6931472
    %v695 = vlog2.pop %v672
    %v696 = vmul.f32 %v695, 0.6931472
    %v697 = vlog2.pop %v673
    %v698 = vmul.f32 %v697, 0.6931472
    %v699 = vlog2.pop %v674
    %v700 = vmul.f32 %v699, 0.6931472
    %v701 = vlog2.pop %v675
    %v702 = vmul.f32 %v701, 0.6931472
    %v703 = vlog2.pop %v676
    %v704 = vmul.f32 %v703, 0.6931472
    %v705 = vlog2.pop %v677
    %v706 = vmul.f32 %v705, 0.6931472
    %v707 = vlog2.pop %v678
    %v708 = vmul.f32 %v707, 0.6931472
    %v709 = vlog2.pop %v679
    %v710 = vmul.f32 %v709, 0.6931472
    %v711 = vlog2.pop %v680
    %v712 = vmul.f32 %v711, 0.6931472
    %v713 = vmul.f32 %v682, 0.4342945
    %v714 = vmul.f32 %v684, 0.4342945
    %v715 = vmul.f32 %v686, 0.4342945
    %v716 = vmul.f32 %v688, 0.4342945
    %v717 = vmul.f32 %v690, 0.4342945
    %v718 = vmul.f32 %v692, 0.4342945
    %v719 = vmul.f32 %v694, 0.4342945
    %v720 = vmul.f32 %v696, 0.4342945
    %v721 = vmul.f32 %v698, 0.4342945
    %v722 = vmul.f32 %v700, 0.4342945
    %v723 = vmul.f32 %v702, 0.4342945
    %v724 = vmul.f32 %v704, 0.4342945
    %v725 = vmul.f32 %v706, 0.4342945
    %v726 = vmul.f32 %v708, 0.4342945
    %v727 = vmul.f32 %v710, 0.4342945
    %v728 = vmul.f32 %v712, 0.4342945
    %v729 = vlaneseq
    %v730 = vshrl.u32 %v729, 7
    %v731 = vadd.s32 %v730, 8
    %v732 = vadd.s32 %v730, 16
    %v733 = vadd.s32 %v730, 24
    %v734 = vadd.s32 %v730, 32
    %v735 = vadd.s32 %v730, 40
    %v736 = vadd.s32 %v730, 48
    %v737 = vadd.s32 %v730, 56
    %v738 = vadd.s32 %v730, 64
    %v739 = vadd.s32 %v730, 72
    %v740 = vadd.s32 %v730, 80
    %v741 = vadd.s32 %v730, 88
    %v742 = vadd.s32 %v730, 96
    %v743 = vadd.s32 %v730, 104
    %v744 = vadd.s32 %v730, 112
    %v745 = vadd.s32 %v730, 120
    %vm746 = vcmp.eq.s32.totalorder %v730, 16
    %vm747 = vcmp.eq.s32.totalorder %v731, 16
    %vm748 = vcmp.eq.s32.totalorder %v732, 16
    %vm749 = vcmp.eq.s32.totalorder %v733, 16
    %vm750 = vcmp.eq.s32.totalorder %v734, 16
    %vm751 = vcmp.eq.s32.totalorder %v735, 16
    %vm752 = vcmp.eq.s32.totalorder %v736, 16
    %vm753 = vcmp.eq.s32.totalorder %v737, 16
    %vm754 = vcmp.eq.s32.totalorder %v738, 16
    %vm755 = vcmp.eq.s32.totalorder %v739, 16
    %vm756 = vcmp.eq.s32.totalorder %v740, 16
    %vm757 = vcmp.eq.s32.totalorder %v741, 16
    %vm758 = vcmp.eq.s32.totalorder %v742, 16
    %vm759 = vcmp.eq.s32.totalorder %v743, 16
    %vm760 = vcmp.eq.s32.totalorder %v744, 16
    %vm761 = vcmp.eq.s32.totalorder %v745, 16
    %v762 = vsel %vm746, %v503, %v713
    %v763 = vsel %vm747, %v503, %v714
    %v764 = vsel %vm748, %v503, %v715
    %v765 = vsel %vm749, %v503, %v716
    %v766 = vsel %vm750, %v503, %v717
    %v767 = vsel %vm751, %v503, %v718
    %v768 = vsel %vm752, %v503, %v719
    %v769 = vsel %vm753, %v503, %v720
    %v770 = vsel %vm754, %v503, %v721
    %v771 = vsel %vm755, %v503, %v722
    %v772 = vsel %vm756, %v503, %v723
    %v773 = vsel %vm757, %v503, %v724
    %v774 = vsel %vm758, %v503, %v725
    %v775 = vsel %vm759, %v503, %v726
    %v776 = vsel %vm760, %v503, %v727
    %v777 = vsel %vm761, %v503, %v728
    %778 = vst [vmem:[#allocation9] sm:$0xff] %v762
    %779 = vst [vmem:[#allocation9 + $0x8] sm:$0xff] %v763
    %780 = vst [vmem:[#allocation9 + $0x10] sm:$0xff] %v764
    %781 = vst [vmem:[#allocation9 + $0x18] sm:$0xff] %v765
    %782 = vst [vmem:[#allocation9 + $0x20] sm:$0xff] %v766
    %783 = vst [vmem:[#allocation9 + $0x28] sm:$0xff] %v767
    %784 = vst [vmem:[#allocation9 + $0x30] sm:$0xff] %v768
    %785 = vst [vmem:[#allocation9 + $0x38] sm:$0xff] %v769
    %786 = vst [vmem:[#allocation9 + $0x40] sm:$0xff] %v770
    %787 = vst [vmem:[#allocation9 + $0x48] sm:$0xff] %v771
    %788 = vst [vmem:[#allocation9 + $0x50] sm:$0xff] %v772
    %789 = vst [vmem:[#allocation9 + $0x58] sm:$0xff] %v773
    %790 = vst [vmem:[#allocation9 + $0x60] sm:$0xff] %v774
    %791 = vst [vmem:[#allocation9 + $0x68] sm:$0xff] %v775
    %792 = vst [vmem:[#allocation9 + $0x70] sm:$0xff] %v776
    %793 = vst [vmem:[#allocation9 + $0x78] sm:$0xff] %v777
    // Predicated region
    $region26: #{tpu_custom_call.1} parent=1 // pred_check
      _
    $region27: #{tpu_custom_call.1} parent=1 // pred_check_branch
      %795 = sbr.rel (0) target = $region29
    $region28: #{tpu_custom_call.1} parent=1 // pred_region
      %s797 = ssub.s32 2048, 2048
      %798 = vsyncadd [#allocation4], %s797
      %s799 = sshll.u32 [#allocation8], 4
      %s800 = int_to_ptr.vmem [resolvable:$true] %s799
      %805 = dma.vmem_to_hbm [thread:$0]  %s800, 2048, %s3, [#allocation4], 128, 128, 8
    $region29: #{tpu_custom_call.1} parent=1 // pred_fallthru
      _
    // Predicated region
    $region30: #{tpu_custom_call.1} parent=1 // pred_check
      _
    $region31: #{tpu_custom_call.1} parent=1 // pred_check_branch
      %807 = sbr.rel (0) target = $region33
    $region32: #{tpu_custom_call.1} parent=1 // pred_region
      %s809 = ssub.s32 2048, 2048
      %810 = vsyncadd [#allocation10], %s809
      %s811 = sshll.u32 [#allocation9], 4
      %s812 = int_to_ptr.vmem [resolvable:$true] %s811
      %817 = dma.vmem_to_hbm [thread:$0]  %s812, 2048, %s4, [#allocation10], 128, 128, 8
    $region33: #{tpu_custom_call.1} parent=1 // pred_fallthru
      _
    // Predicated region
    $region34: #{tpu_custom_call.1} parent=1 // pred_check
      _
    $region35: #{tpu_custom_call.1} parent=1 // pred_check_branch
      %819 = sbr.rel (0) target = $region37
    $region36: #{tpu_custom_call.1} parent=1 // pred_region
      %820 = dma.done [#allocation4], 2048
    $region37: #{tpu_custom_call.1} parent=1 // pred_fallthru
      _
    // Predicated region
    $region38: #{tpu_custom_call.1} parent=1 // pred_check
      _
    $region39: #{tpu_custom_call.1} parent=1 // pred_check_branch
      %822 = sbr.rel (0) target = $region41
    $region40: #{tpu_custom_call.1} parent=1 // pred_region
      %823 = dma.done [#allocation10], 2048
    $region41: #{tpu_custom_call.1} parent=1 // pred_fallthru
      _
    %824 = vsyncpa [#allocation3], 1
    %825 = vsyncpa [#allocation6], 1
    %826 = vsyncpa [#allocation4], 1
    %827 = vsyncpa [#allocation10], 1

</llo_original>
